<compile_context>
chip_gen: v5e
topology: v5e:2x2
jax: 0.10.0
libtpu: 0.0.40
codegen_flags: <defaults>
</compile_context>

<pallas_src>
import functools

import jax
import jax.numpy as jnp
from jax.experimental import pallas as pl
from jax.experimental.pallas import tpu as pltpu


# --------------------------------------------------------------------------
# Pallas kernel: fused 3x3 conv (in-kernel 9-tap accumulate) + BN affine
#                + optional shortcut (identity add / fused 1x1 conv + BN) + ReLU
# Grid is (N,): each step handles one batch image's full output map.
# --------------------------------------------------------------------------
def _fused_conv_bn_kernel(x_ref, w_ref, sc_ref, bi_ref, *rest,
                          stride, ho, wo, mode, apply_relu):
    if mode == "identity":
        res_ref, o_ref = rest
    elif mode == "proj":
        xs_ref, ws_ref, ssc_ref, sbi_ref, o_ref = rest
    else:
        (o_ref,) = rest

    cin = x_ref.shape[-1]

    # Unrolled 9-tap accumulation; weights stay resident in VMEM across taps.
    acc = None
    for t in range(9):
        kh, kw = divmod(t, 3)
        p = (kh % stride) * stride + (kw % stride)    # stride phase index
        dh, dw = kh // stride, kw // stride           # offset inside the phase grid
        xt = x_ref[p, dh:dh + ho, dw:dw + wo, :].reshape(ho * wo, cin)   # bf16
        d = jnp.dot(xt, w_ref[t], preferred_element_type=jnp.float32)   # MXU, f32 acc
        acc = d if acc is None else acc + d

    out = acc * sc_ref[...] + bi_ref[...]             # folded BN (f32 epilogue)

    if mode == "identity":
        out = out + res_ref[0]                        # f32 identity residual
    elif mode == "proj":                              # fused 1x1 conv + BN shortcut
        r = jnp.dot(xs_ref[0], ws_ref[...], preferred_element_type=jnp.float32)
        out = out + (r * ssc_ref[...] + sbi_ref[...])

    if apply_relu:
        out = jnp.maximum(out, 0.0)
    o_ref[0] = out.astype(o_ref.dtype)


def conv3x3_bn_fused(x_nhwc, w_taps, scale, bias, *, stride, relu,
                     identity_res=None, proj=None, out_dtype=jnp.float32):
    """Fused 3x3 conv (pad=1, given stride) + BN affine [+ shortcut] [+ ReLU].

    x_nhwc : (N, H, W, Cin)           w_taps : (9, Cin, Cout)  (tap-major, kh*3+kw)
    identity_res : (N, Ho, Wo, Cout) f32 residual, or
    proj = (xs, ws, short_scale, short_bias) for the 1x1-conv/BN projection shortcut.
    Returns (N, Ho, Wo, Cout) in out_dtype.
    """
    N, H, W, Cin = x_nhwc.shape
    Cout = w_taps.shape[-1]
    s = stride
    Ho = (H - 1) // s + 1
    Wo = (W - 1) // s + 1
    halo = 2 // s                       # extra rows/cols each phase grid needs
    Hph, Wph = Ho + halo, Wo + halo
    Hp, Wp = s * Hph, s * Wph           # padded spatial extent

    # Pad (conv pad=1 top/left; bottom/right padded up to Hp/Wp — the extra zeros are
    # never read by a valid output tap) and decompose into s*s stride phases so every
    # in-kernel tap window is a contiguous static slice (handles stride without im2col).
    xp = jnp.pad(x_nhwc.astype(jnp.bfloat16),
                 ((0, 0), (1, Hp - H - 1), (1, Wp - W - 1), (0, 0)))
    xph = xp.reshape(N, Hph, s, Wph, s, Cin).transpose(0, 2, 4, 1, 3, 5)
    xph = xph.reshape(N * s * s, Hph, Wph, Cin)

    in_specs = [
        pl.BlockSpec((s * s, Hph, Wph, Cin), lambda n: (n, 0, 0, 0)),  # per-image slab
        pl.BlockSpec((9, Cin, Cout), lambda n: (0, 0, 0)),             # resident weights
        pl.BlockSpec((1, Cout), lambda n: (0, 0)),                     # bn scale
        pl.BlockSpec((1, Cout), lambda n: (0, 0)),                     # bn bias
    ]
    inputs = [xph,
              w_taps.astype(jnp.bfloat16),
              scale.reshape(1, Cout).astype(jnp.float32),
              bias.reshape(1, Cout).astype(jnp.float32)]

    mode = "none"
    if identity_res is not None:
        mode = "identity"
        in_specs.append(pl.BlockSpec((1, Ho * Wo, Cout), lambda n: (n, 0, 0)))
        inputs.append(identity_res.reshape(N, Ho * Wo, Cout).astype(jnp.float32))
    elif proj is not None:
        mode = "proj"
        xs, ws, ssc, sbi = proj
        Cs = xs.shape[-1]
        in_specs += [pl.BlockSpec((1, Ho * Wo, Cs), lambda n: (n, 0, 0)),
                     pl.BlockSpec((Cs, Cout), lambda n: (0, 0)),
                     pl.BlockSpec((1, Cout), lambda n: (0, 0)),
                     pl.BlockSpec((1, Cout), lambda n: (0, 0))]
        inputs += [xs.reshape(N, Ho * Wo, Cs).astype(jnp.bfloat16),
                   ws.astype(jnp.bfloat16),
                   ssc.reshape(1, Cout).astype(jnp.float32),
                   sbi.reshape(1, Cout).astype(jnp.float32)]

    kernel = functools.partial(_fused_conv_bn_kernel, stride=s, ho=Ho, wo=Wo,
                               mode=mode, apply_relu=relu)
    out = pl.pallas_call(
        kernel,
        out_shape=jax.ShapeDtypeStruct((N, Ho * Wo, Cout), out_dtype),
        grid=(N,),
        in_specs=in_specs,
        out_specs=pl.BlockSpec((1, Ho * Wo, Cout), lambda n: (n, 0, 0)),
        compiler_params=pltpu.CompilerParams(
            dimension_semantics=("parallel",)),        # batch axis -> 2 TCs on v7x
    )(*inputs)
    return out.reshape(N, Ho, Wo, Cout)


# --------------------------------------------------------------------------
# Glue: BN folding + block forward
# --------------------------------------------------------------------------
def bn_fold(gamma, beta, mean, var, eps=1e-5):
    scale = gamma / jnp.sqrt(var + eps)
    return scale, beta - mean * scale


def ara_basic_block_forward(params, x_nchw, ara, *, in_planes, planes, stride):
    x = jnp.transpose(x_nchw, (0, 2, 3, 1)).astype(jnp.float32)   # NHWC

    # conv1 (3x3 / stride) + bn1 + relu1.  Conv2d_ARA passes ARA through untouched.
    w1 = jnp.transpose(params["conv1_w"], (2, 3, 1, 0)).reshape(9, in_planes, planes)
    s1, b1 = bn_fold(params["bn1_gamma"], params["bn1_beta"],
                     params["bn1_mean"], params["bn1_var"])
    out1 = conv3x3_bn_fused(x, w1, s1, b1, stride=stride, relu=True,
                            out_dtype=jnp.bfloat16)   # bf16 -> feeds conv2 cheaply

    # conv2 (3x3 / 1) + bn2 + shortcut + relu2, all fused into one kernel.
    w2 = jnp.transpose(params["conv2_w"], (2, 3, 1, 0)).reshape(9, planes, planes)
    s2, b2 = bn_fold(params["bn2_gamma"], params["bn2_beta"],
                     params["bn2_mean"], params["bn2_var"])

    if stride == 1 and in_planes == planes:
        out2 = conv3x3_bn_fused(out1, w2, s2, b2, stride=1, relu=True,
                                identity_res=x)
    else:
        xs = x[:, ::stride, ::stride, :]              # input of the 1x1/stride conv
        ws = params["short_conv_w"].reshape(planes, in_planes).T
        ss, sb = bn_fold(params["short_bn_gamma"], params["short_bn_beta"],
                         params["short_bn_mean"], params["short_bn_var"])
        out2 = conv3x3_bn_fused(out1, w2, s2, b2, stride=1, relu=True,
                                proj=(xs, ws, ss, sb))

    return jnp.transpose(out2, (0, 3, 1, 2)), ara     # back to NCHW


# --------------------------------------------------------------------------
# Plain-XLA reference (for correctness check).  bf16_ops=True rounds conv
# operands to bf16 (f32 accumulation), matching the kernel's MXU precision.
# --------------------------------------------------------------------------
def reference_forward(params, x, ara, *, in_planes, planes, stride, bf16_ops=False):
    def q(a):
        return a.astype(jnp.bfloat16).astype(jnp.float32) if bf16_ops else a

    def conv(x_, w, s, pad):
        return jax.lax.conv_general_dilated(
            q(x_), q(w), (s, s), [(pad, pad), (pad, pad)],
            dimension_numbers=("NCHW", "OIHW", "NCHW"),
            preferred_element_type=jnp.float32)

    def bn(x_, g, b, m, v, eps=1e-5):
        sc = g / jnp.sqrt(v + eps)
        return x_ * sc[None, :, None, None] + (b - m * sc)[None, :, None, None]

    out = conv(x, params["conv1_w"], stride, 1)
    out = jnp.maximum(bn(out, params["bn1_gamma"], params["bn1_beta"],
                         params["bn1_mean"], params["bn1_var"]), 0.0)
    out = bn(conv(out, params["conv2_w"], 1, 1),
             params["bn2_gamma"], params["bn2_beta"],
             params["bn2_mean"], params["bn2_var"])
    if stride == 1 and in_planes == planes:
        out = out + x
    else:
        xs = conv(x, params["short_conv_w"], stride, 0)
        out = out + bn(xs, params["short_bn_gamma"], params["short_bn_beta"],
                       params["short_bn_mean"], params["short_bn_var"])
    return jnp.maximum(out, 0.0), ara


# --------------------------------------------------------------------------
if __name__ == "__main__":
    def bn_params(k, c):
        k1, k2, k3, k4 = jax.random.split(k, 4)
        return (jax.random.uniform(k1, (c,), jnp.float32, 0.5, 1.5),   # gamma
                jax.random.normal(k2, (c,), jnp.float32) * 0.1,        # beta
                jax.random.normal(k3, (c,), jnp.float32) * 0.1,        # running_mean
                jax.random.uniform(k4, (c,), jnp.float32, 0.5, 1.5))   # running_var

    def make_params(key, in_planes, planes):
        keys = jax.random.split(key, 6)
        g1, b1, m1, v1 = bn_params(keys[3], planes)
        g2, b2, m2, v2 = bn_params(keys[4], planes)
        gs, bs_, ms, vs = bn_params(keys[5], planes)
        return {
            "conv1_w": jax.random.normal(keys[0], (planes, in_planes, 3, 3), jnp.float32) * 0.1,
            "conv2_w": jax.random.normal(keys[1], (planes, planes, 3, 3), jnp.float32) * 0.1,
            "short_conv_w": jax.random.normal(keys[2], (planes, in_planes, 1, 1), jnp.float32) * 0.1,
            "bn1_gamma": g1, "bn1_beta": b1, "bn1_mean": m1, "bn1_var": v1,
            "bn2_gamma": g2, "bn2_beta": b2, "bn2_mean": m2, "bn2_var": v2,
            "short_bn_gamma": gs, "short_bn_beta": bs_, "short_bn_mean": ms, "short_bn_var": vs,
        }

    key = jax.random.PRNGKey(0)
    k0, k1, k_ara = jax.random.split(key, 3)
    ara = jax.random.normal(k_ara, (4,), jnp.float32)   # opaque ARA payload

    configs = [
        dict(key=k0, in_planes=4, planes=8, stride=2, N=2, H=16, W=16),  # projection shortcut
        dict(key=k1, in_planes=8, planes=8, stride=1, N=2, H=16, W=16),  # identity shortcut
    ]

    for cfg in configs:
        kp, kx = jax.random.split(cfg["key"], 2)
        params = make_params(kp, cfg["in_planes"], cfg["planes"])
        x = jax.random.normal(kx, (cfg["N"], cfg["in_planes"], cfg["H"], cfg["W"]),
                              jnp.float32)

        out, ara_out = ara_basic_block_forward(
            params, x, ara, in_planes=cfg["in_planes"], planes=cfg["planes"],
            stride=cfg["stride"])
        out = jax.block_until_ready(out)

        ref, _ = reference_forward(params, x, ara, in_planes=cfg["in_planes"],
                                   planes=cfg["planes"], stride=cfg["stride"],
                                   bf16_ops=True)
        ref = jax.block_until_ready(ref)

        Ho = (cfg["H"] - 1) // cfg["stride"] + 1
        Wo = (cfg["W"] - 1) // cfg["stride"] + 1
        assert out.shape == (cfg["N"], cfg["planes"], Ho, Wo), out.shape
        err = float(jnp.max(jnp.abs(out - ref)))
        assert jnp.allclose(out, ref, atol=1e-2, rtol=1e-2), err
        assert jnp.array_equal(ara_out, ara)

    print("KERNEL_OK")
</pallas_src>

<mosaic_0001>
module attributes {stable_mosaic.version = 11 : i64} {
  func.func @_fused_conv_bn_kernel(%arg0: i32, %arg1: memref<4x9x9x4xbf16, #tpu.memory_space<vmem>>, %arg2: memref<9x4x8xbf16, #tpu.memory_space<vmem>>, %arg3: memref<1x8xf32, #tpu.memory_space<vmem>>, %arg4: memref<1x8xf32, #tpu.memory_space<vmem>>, %arg5: memref<1x64x8xbf16, #tpu.memory_space<vmem>>) attributes {dimension_semantics = [#tpu.dimension_semantics<parallel>], iteration_bounds = array<i64: 2>, scalar_prefetch = 0 : i64, scratch_operands = 0 : i64, tpu.core_type = #tpu.core_type<tc>, window_params = [{transform_indices = @transform_0, window_bounds = array<i64: 4, 9, 9, 4>}, {pipeline_mode = #tpu.pipeline_mode<synchronous>, transform_indices = @transform_1, window_bounds = array<i64: 9, 4, 8>}, {pipeline_mode = #tpu.pipeline_mode<synchronous>, transform_indices = @transform_2, window_bounds = array<i64: 1, 8>}, {pipeline_mode = #tpu.pipeline_mode<synchronous>, transform_indices = @transform_3, window_bounds = array<i64: 1, 8>}, {transform_indices = @transform_4, window_bounds = array<i64: 1, 64, 8>}]} {
    %c0 = arith.constant 0 : index
    %c0_0 = arith.constant 0 : index
    %c0_1 = arith.constant 0 : index
    %c0_2 = arith.constant 0 : index
    %0 = vector.load %arg1[%c0, %c0_0, %c0_1, %c0_2] : memref<4x9x9x4xbf16, #tpu.memory_space<vmem>>, vector<1x8x8x4xbf16>
    %1 = vector.shape_cast %0 : vector<1x8x8x4xbf16> to vector<8x8x4xbf16>
    %2 = vector.shape_cast %1 : vector<8x8x4xbf16> to vector<64x4xbf16>
    %c0_3 = arith.constant 0 : index
    %c0_4 = arith.constant 0 : index
    %c0_5 = arith.constant 0 : index
    %3 = vector.load %arg2[%c0_3, %c0_4, %c0_5] : memref<9x4x8xbf16, #tpu.memory_space<vmem>>, vector<1x4x8xbf16>
    %4 = vector.shape_cast %3 : vector<1x4x8xbf16> to vector<4x8xbf16>
    %cst = arith.constant dense<0.000000e+00> : vector<64x8xf32>
    %5 = tpu.matmul %2, %4, %cst {dimension_numbers = #tpu.dot_dimension_numbers<[1], [0], [0], [1], [0, 0, 1, 1], [], []>} : vector<64x4xbf16>, vector<4x8xbf16>, vector<64x8xf32> -> vector<64x8xf32>
    %c1 = arith.constant 1 : index
    %c0_6 = arith.constant 0 : index
    %c0_7 = arith.constant 0 : index
    %c0_8 = arith.constant 0 : index
    %6 = vector.load %arg1[%c1, %c0_6, %c0_7, %c0_8] : memref<4x9x9x4xbf16, #tpu.memory_space<vmem>>, vector<1x8x8x4xbf16>
    %7 = vector.shape_cast %6 : vector<1x8x8x4xbf16> to vector<8x8x4xbf16>
    %8 = vector.shape_cast %7 : vector<8x8x4xbf16> to vector<64x4xbf16>
    %c1_9 = arith.constant 1 : index
    %c0_10 = arith.constant 0 : index
    %c0_11 = arith.constant 0 : index
    %9 = vector.load %arg2[%c1_9, %c0_10, %c0_11] : memref<9x4x8xbf16, #tpu.memory_space<vmem>>, vector<1x4x8xbf16>
    %10 = vector.shape_cast %9 : vector<1x4x8xbf16> to vector<4x8xbf16>
    %cst_12 = arith.constant dense<0.000000e+00> : vector<64x8xf32>
    %11 = tpu.matmul %8, %10, %cst_12 {dimension_numbers = #tpu.dot_dimension_numbers<[1], [0], [0], [1], [0, 0, 1, 1], [], []>} : vector<64x4xbf16>, vector<4x8xbf16>, vector<64x8xf32> -> vector<64x8xf32>
    %12 = arith.addf %5, %11 : vector<64x8xf32>
    %c0_13 = arith.constant 0 : index
    %c0_14 = arith.constant 0 : index
    %c1_15 = arith.constant 1 : index
    %c0_16 = arith.constant 0 : index
    %13 = vector.load %arg1[%c0_13, %c0_14, %c1_15, %c0_16] : memref<4x9x9x4xbf16, #tpu.memory_space<vmem>>, vector<1x8x8x4xbf16>
    %14 = vector.shape_cast %13 : vector<1x8x8x4xbf16> to vector<8x8x4xbf16>
    %15 = vector.shape_cast %14 : vector<8x8x4xbf16> to vector<64x4xbf16>
    %c2 = arith.constant 2 : index
    %c0_17 = arith.constant 0 : index
    %c0_18 = arith.constant 0 : index
    %16 = vector.load %arg2[%c2, %c0_17, %c0_18] : memref<9x4x8xbf16, #tpu.memory_space<vmem>>, vector<1x4x8xbf16>
    %17 = vector.shape_cast %16 : vector<1x4x8xbf16> to vector<4x8xbf16>
    %cst_19 = arith.constant dense<0.000000e+00> : vector<64x8xf32>
    %18 = tpu.matmul %15, %17, %cst_19 {dimension_numbers = #tpu.dot_dimension_numbers<[1], [0], [0], [1], [0, 0, 1, 1], [], []>} : vector<64x4xbf16>, vector<4x8xbf16>, vector<64x8xf32> -> vector<64x8xf32>
    %19 = arith.addf %12, %18 : vector<64x8xf32>
    %c2_20 = arith.constant 2 : index
    %c0_21 = arith.constant 0 : index
    %c0_22 = arith.constant 0 : index
    %c0_23 = arith.constant 0 : index
    %20 = vector.load %arg1[%c2_20, %c0_21, %c0_22, %c0_23] : memref<4x9x9x4xbf16, #tpu.memory_space<vmem>>, vector<1x8x8x4xbf16>
    %21 = vector.shape_cast %20 : vector<1x8x8x4xbf16> to vector<8x8x4xbf16>
    %22 = vector.shape_cast %21 : vector<8x8x4xbf16> to vector<64x4xbf16>
    %c3 = arith.constant 3 : index
    %c0_24 = arith.constant 0 : index
    %c0_25 = arith.constant 0 : index
    %23 = vector.load %arg2[%c3, %c0_24, %c0_25] : memref<9x4x8xbf16, #tpu.memory_space<vmem>>, vector<1x4x8xbf16>
    %24 = vector.shape_cast %23 : vector<1x4x8xbf16> to vector<4x8xbf16>
    %cst_26 = arith.constant dense<0.000000e+00> : vector<64x8xf32>
    %25 = tpu.matmul %22, %24, %cst_26 {dimension_numbers = #tpu.dot_dimension_numbers<[1], [0], [0], [1], [0, 0, 1, 1], [], []>} : vector<64x4xbf16>, vector<4x8xbf16>, vector<64x8xf32> -> vector<64x8xf32>
    %26 = arith.addf %19, %25 : vector<64x8xf32>
    %c3_27 = arith.constant 3 : index
    %c0_28 = arith.constant 0 : index
    %c0_29 = arith.constant 0 : index
    %c0_30 = arith.constant 0 : index
    %27 = vector.load %arg1[%c3_27, %c0_28, %c0_29, %c0_30] : memref<4x9x9x4xbf16, #tpu.memory_space<vmem>>, vector<1x8x8x4xbf16>
    %28 = vector.shape_cast %27 : vector<1x8x8x4xbf16> to vector<8x8x4xbf16>
    %29 = vector.shape_cast %28 : vector<8x8x4xbf16> to vector<64x4xbf16>
    %c4 = arith.constant 4 : index
    %c0_31 = arith.constant 0 : index
    %c0_32 = arith.constant 0 : index
    %30 = vector.load %arg2[%c4, %c0_31, %c0_32] : memref<9x4x8xbf16, #tpu.memory_space<vmem>>, vector<1x4x8xbf16>
    %31 = vector.shape_cast %30 : vector<1x4x8xbf16> to vector<4x8xbf16>
    %cst_33 = arith.constant dense<0.000000e+00> : vector<64x8xf32>
    %32 = tpu.matmul %29, %31, %cst_33 {dimension_numbers = #tpu.dot_dimension_numbers<[1], [0], [0], [1], [0, 0, 1, 1], [], []>} : vector<64x4xbf16>, vector<4x8xbf16>, vector<64x8xf32> -> vector<64x8xf32>
    %33 = arith.addf %26, %32 : vector<64x8xf32>
    %c2_34 = arith.constant 2 : index
    %c0_35 = arith.constant 0 : index
    %c1_36 = arith.constant 1 : index
    %c0_37 = arith.constant 0 : index
    %34 = vector.load %arg1[%c2_34, %c0_35, %c1_36, %c0_37] : memref<4x9x9x4xbf16, #tpu.memory_space<vmem>>, vector<1x8x8x4xbf16>
    %35 = vector.shape_cast %34 : vector<1x8x8x4xbf16> to vector<8x8x4xbf16>
    %36 = vector.shape_cast %35 : vector<8x8x4xbf16> to vector<64x4xbf16>
    %c5 = arith.constant 5 : index
    %c0_38 = arith.constant 0 : index
    %c0_39 = arith.constant 0 : index
    %37 = vector.load %arg2[%c5, %c0_38, %c0_39] : memref<9x4x8xbf16, #tpu.memory_space<vmem>>, vector<1x4x8xbf16>
    %38 = vector.shape_cast %37 : vector<1x4x8xbf16> to vector<4x8xbf16>
    %cst_40 = arith.constant dense<0.000000e+00> : vector<64x8xf32>
    %39 = tpu.matmul %36, %38, %cst_40 {dimension_numbers = #tpu.dot_dimension_numbers<[1], [0], [0], [1], [0, 0, 1, 1], [], []>} : vector<64x4xbf16>, vector<4x8xbf16>, vector<64x8xf32> -> vector<64x8xf32>
    %40 = arith.addf %33, %39 : vector<64x8xf32>
    %c0_41 = arith.constant 0 : index
    %c1_42 = arith.constant 1 : index
    %c0_43 = arith.constant 0 : index
    %c0_44 = arith.constant 0 : index
    %41 = vector.load %arg1[%c0_41, %c1_42, %c0_43, %c0_44] : memref<4x9x9x4xbf16, #tpu.memory_space<vmem>>, vector<1x8x8x4xbf16>
    %42 = vector.shape_cast %41 : vector<1x8x8x4xbf16> to vector<8x8x4xbf16>
    %43 = vector.shape_cast %42 : vector<8x8x4xbf16> to vector<64x4xbf16>
    %c6 = arith.constant 6 : index
    %c0_45 = arith.constant 0 : index
    %c0_46 = arith.constant 0 : index
    %44 = vector.load %arg2[%c6, %c0_45, %c0_46] : memref<9x4x8xbf16, #tpu.memory_space<vmem>>, vector<1x4x8xbf16>
    %45 = vector.shape_cast %44 : vector<1x4x8xbf16> to vector<4x8xbf16>
    %cst_47 = arith.constant dense<0.000000e+00> : vector<64x8xf32>
    %46 = tpu.matmul %43, %45, %cst_47 {dimension_numbers = #tpu.dot_dimension_numbers<[1], [0], [0], [1], [0, 0, 1, 1], [], []>} : vector<64x4xbf16>, vector<4x8xbf16>, vector<64x8xf32> -> vector<64x8xf32>
    %47 = arith.addf %40, %46 : vector<64x8xf32>
    %c1_48 = arith.constant 1 : index
    %c1_49 = arith.constant 1 : index
    %c0_50 = arith.constant 0 : index
    %c0_51 = arith.constant 0 : index
    %48 = vector.load %arg1[%c1_48, %c1_49, %c0_50, %c0_51] : memref<4x9x9x4xbf16, #tpu.memory_space<vmem>>, vector<1x8x8x4xbf16>
    %49 = vector.shape_cast %48 : vector<1x8x8x4xbf16> to vector<8x8x4xbf16>
    %50 = vector.shape_cast %49 : vector<8x8x4xbf16> to vector<64x4xbf16>
    %c7 = arith.constant 7 : index
    %c0_52 = arith.constant 0 : index
    %c0_53 = arith.constant 0 : index
    %51 = vector.load %arg2[%c7, %c0_52, %c0_53] : memref<9x4x8xbf16, #tpu.memory_space<vmem>>, vector<1x4x8xbf16>
    %52 = vector.shape_cast %51 : vector<1x4x8xbf16> to vector<4x8xbf16>
    %cst_54 = arith.constant dense<0.000000e+00> : vector<64x8xf32>
    %53 = tpu.matmul %50, %52, %cst_54 {dimension_numbers = #tpu.dot_dimension_numbers<[1], [0], [0], [1], [0, 0, 1, 1], [], []>} : vector<64x4xbf16>, vector<4x8xbf16>, vector<64x8xf32> -> vector<64x8xf32>
    %54 = arith.addf %47, %53 : vector<64x8xf32>
    %c0_55 = arith.constant 0 : index
    %c1_56 = arith.constant 1 : index
    %c1_57 = arith.constant 1 : index
    %c0_58 = arith.constant 0 : index
    %55 = vector.load %arg1[%c0_55, %c1_56, %c1_57, %c0_58] : memref<4x9x9x4xbf16, #tpu.memory_space<vmem>>, vector<1x8x8x4xbf16>
    %56 = vector.shape_cast %55 : vector<1x8x8x4xbf16> to vector<8x8x4xbf16>
    %57 = vector.shape_cast %56 : vector<8x8x4xbf16> to vector<64x4xbf16>
    %c8 = arith.constant 8 : index
    %c0_59 = arith.constant 0 : index
    %c0_60 = arith.constant 0 : index
    %58 = vector.load %arg2[%c8, %c0_59, %c0_60] : memref<9x4x8xbf16, #tpu.memory_space<vmem>>, vector<1x4x8xbf16>
    %59 = vector.shape_cast %58 : vector<1x4x8xbf16> to vector<4x8xbf16>
    %cst_61 = arith.constant dense<0.000000e+00> : vector<64x8xf32>
    %60 = tpu.matmul %57, %59, %cst_61 {dimension_numbers = #tpu.dot_dimension_numbers<[1], [0], [0], [1], [0, 0, 1, 1], [], []>} : vector<64x4xbf16>, vector<4x8xbf16>, vector<64x8xf32> -> vector<64x8xf32>
    %61 = arith.addf %54, %60 : vector<64x8xf32>
    %c0_62 = arith.constant 0 : index
    %c0_63 = arith.constant 0 : index
    %62 = vector.load %arg3[%c0_62, %c0_63] : memref<1x8xf32, #tpu.memory_space<vmem>>, vector<1x8xf32>
    %63 = vector.broadcast %62 : vector<1x8xf32> to vector<64x8xf32>
    %64 = arith.mulf %61, %63 : vector<64x8xf32>
    %c0_64 = arith.constant 0 : index
    %c0_65 = arith.constant 0 : index
    %65 = vector.load %arg4[%c0_64, %c0_65] : memref<1x8xf32, #tpu.memory_space<vmem>>, vector<1x8xf32>
    %66 = vector.broadcast %65 : vector<1x8xf32> to vector<64x8xf32>
    %67 = arith.addf %64, %66 : vector<64x8xf32>
    %cst_66 = arith.constant 0.000000e+00 : f32
    %68 = vector.broadcast %cst_66 : f32 to vector<64x8xf32>
    %69 = arith.maximumf %67, %68 : vector<64x8xf32>
    %70 = arith.truncf %69 : vector<64x8xf32> to vector<64x8xbf16>
    %c0_67 = arith.constant 0 : index
    %c0_68 = arith.constant 0 : index
    %c0_69 = arith.constant 0 : index
    %71 = vector.load %arg5[%c0_67, %c0_68, %c0_69] : memref<1x64x8xbf16, #tpu.memory_space<vmem>>, vector<1x64x8xbf16>
    %72 = vector.shape_cast %71 : vector<1x64x8xbf16> to vector<64x8xbf16>
    %73 = vector.shape_cast %70 : vector<64x8xbf16> to vector<1x64x8xbf16>
    tpu.vector_store %arg5[%c0_67, %c0_68, %c0_69], %73 {strides = array<i32>} : memref<1x64x8xbf16, #tpu.memory_space<vmem>>, vector<1x64x8xbf16>,
    return
  }
  func.func @transform_0(%arg0: i32) -> (i32, i32, i32, i32) {
    %c0_i32 = arith.constant 0 : i32
    %c0_i32_0 = arith.constant 0 : i32
    %c0_i32_1 = arith.constant 0 : i32
    %c0_i32_2 = arith.constant 0 : i32
    return %arg0, %c0_i32, %c0_i32_0, %c0_i32_1 : i32, i32, i32, i32
  }
  func.func @transform_1(%arg0: i32) -> (i32, i32, i32) {
    %c0_i32 = arith.constant 0 : i32
    %c0_i32_0 = arith.constant 0 : i32
    %c0_i32_1 = arith.constant 0 : i32
    %c0_i32_2 = arith.constant 0 : i32
    return %c0_i32, %c0_i32_0, %c0_i32_1 : i32, i32, i32
  }
  func.func @transform_2(%arg0: i32) -> (i32, i32) {
    %c0_i32 = arith.constant 0 : i32
    %c0_i32_0 = arith.constant 0 : i32
    %c0_i32_1 = arith.constant 0 : i32
    return %c0_i32, %c0_i32_0 : i32, i32
  }
  func.func @transform_3(%arg0: i32) -> (i32, i32) {
    %c0_i32 = arith.constant 0 : i32
    %c0_i32_0 = arith.constant 0 : i32
    %c0_i32_1 = arith.constant 0 : i32
    return %c0_i32, %c0_i32_0 : i32, i32
  }
  func.func @transform_4(%arg0: i32) -> (i32, i32, i32) {
    %c0_i32 = arith.constant 0 : i32
    %c0_i32_0 = arith.constant 0 : i32
    %c0_i32_1 = arith.constant 0 : i32
    return %arg0, %c0_i32, %c0_i32_0 : i32, i32, i32
  }
}

</mosaic_0001>

<llo_original>
// kernel: tpu_custom_call.1
$region0: #{tpu_custom_call.1}
  #allocation0 [shape = 'u32[]', space=smem, size = 0x4, offset = 0x4, fixed_abs, tag = 'smem constant byte address 0x4 - core index']
  #allocation1 [shape = 'u32[72,128]{1,0:T(1,128)}', space=vmem, size = 0x9000, scoped, tag = 'internal scratch']
  %s0 = inlined_call_operand.vmem [shape: bf16[8,9,9,4], index: 0, kind: input, shape index: {}]
  %s1 = inlined_call_operand.vmem [shape: bf16[9,4,8], index: 1, kind: input, shape index: {}]
  %s2 = inlined_call_operand.vmem [shape: f32[1,8], index: 2, kind: input, shape index: {}]
  %s3 = inlined_call_operand.vmem [shape: f32[1,8], index: 3, kind: input, shape index: {}]
  %s4 = inlined_call_operand.vmem [shape: bf16[2,64,8], index: 4, kind: output, shape index: {}]
  %s5 = sld [smem:[#allocation0]]
  $region49: #{tpu_custom_call.1} parent=0
    _
  %s7 = ssub.s32 1, %s5
  %s8 = scalar_select 0, %s7, %s5
  loop: start=0, step=1, limit=4
  $region2: #{tpu_custom_call.1} parent=0 // loop_pre_header
    _
  $region3: #{tpu_custom_call.1} parent=0 // loop_header
    %s10 = sphi 0, %s14
    %p11 = scmp.ge.s32.totalorder %s10, 4
    %s20 = sphi 0, %s22
    %s23 = sphi 0, %s20
    %s24 = sphi 0, %s23
    %s40 = sphi 0, %s24
    %s44 = sphi 0, %s44
    %s46 = sphi 0, %s44
    %s47 = sphi 0, %s46
    %s61 = sphi 0, %s47
    %s65 = sphi 0, %s65
    %s67 = sphi 0, %s65
    %s68 = sphi 0, %s67
    %s82 = sphi 0, %s68
    %s86 = sphi 0, %s86
    %s88 = sphi 0, %s86
    %s89 = sphi 0, %s88
    %s103 = sphi 0, %s89
    %s109 = sphi 0, %s111
    %s112 = sphi 0, %s109
    %s113 = sphi 0, %s112
    %s129 = sphi 0, %s113
  $region4: #{tpu_custom_call.1} parent=0 // loop_header_branch
    %13 = sbr.rel (%p11) target = $region8
  $region5: #{tpu_custom_call.1} parent=0 // loop_body
    %s15 = ssub.s32 %s10, 1
    %s16 = ssub.s32 %s10, 2
    %s17 = sadd.s32 %s10, 1
    %s18 = ssub.s32 %s10, %s17
    %p19 = scmp.eq.s32.totalorder %s18, 0
    %s21 = sadd.s32 %s20, 1
    %s22 = scalar_select %p19, %s20, %s21
    %p25 = pneg %p19
    %p26 = scmp.eq.s32.totalorder %s10, 1
    %p27 = por %p25, %p26
    %p28 = scmp.ne.s32.totalorder %s20, %s23
    %p29 = scmp.eq.s32.totalorder %s10, 0
    %p30 = por %p28, %p29
    %p31 = scmp.ne.s32.totalorder %s20, %s23
    %p32 = scmp.eq.s32.totalorder %s15, 1
    %p33 = por %p31, %p32
    %p34 = scmp.ne.s32.totalorder %s23, %s24
    %p35 = scmp.eq.s32.totalorder %s15, 0
    %p36 = por %p34, %p35
    %p37 = scmp.ne.s32.totalorder %s23, %s24
    %p38 = scmp.eq.s32.totalorder %s16, 1
    %p39 = por %p37, %p38
    %p41 = scmp.ne.s32.totalorder %s24, %s40
    %p42 = scmp.eq.s32.totalorder %s16, 0
    %p43 = por %p41, %p42
    %s45 = sadd.s32 %s44, 1
    %p48 = scmp.eq.s32.totalorder %s10, 1
    %p49 = scmp.ne.s32.totalorder %s44, %s46
    %p50 = scmp.eq.s32.totalorder %s10, 0
    %p51 = por %p49, %p50
    %p52 = scmp.ne.s32.totalorder %s44, %s46
    %p53 = scmp.eq.s32.totalorder %s15, 1
    %p54 = por %p52, %p53
    %p55 = scmp.ne.s32.totalorder %s46, %s47
    %p56 = scmp.eq.s32.totalorder %s15, 0
    %p57 = por %p55, %p56
    %p58 = scmp.ne.s32.totalorder %s46, %s47
    %p59 = scmp.eq.s32.totalorder %s16, 1
    %p60 = por %p58, %p59
    %p62 = scmp.ne.s32.totalorder %s47, %s61
    %p63 = scmp.eq.s32.totalorder %s16, 0
    %p64 = por %p62, %p63
    %s66 = sadd.s32 %s65, 1
    %p69 = scmp.eq.s32.totalorder %s10, 1
    %p70 = scmp.ne.s32.totalorder %s65, %s67
    %p71 = scmp.eq.s32.totalorder %s10, 0
    %p72 = por %p70, %p71
    %p73 = scmp.ne.s32.totalorder %s65, %s67
    %p74 = scmp.eq.s32.totalorder %s15, 1
    %p75 = por %p73, %p74
    %p76 = scmp.ne.s32.totalorder %s67, %s68
    %p77 = scmp.eq.s32.totalorder %s15, 0
    %p78 = por %p76, %p77
    %p79 = scmp.ne.s32.totalorder %s67, %s68
    %p80 = scmp.eq.s32.totalorder %s16, 1
    %p81 = por %p79, %p80
    %p83 = scmp.ne.s32.totalorder %s68, %s82
    %p84 = scmp.eq.s32.totalorder %s16, 0
    %p85 = por %p83, %p84
    %s87 = sadd.s32 %s86, 1
    %p90 = scmp.eq.s32.totalorder %s10, 1
    %p91 = scmp.ne.s32.totalorder %s86, %s88
    %p92 = scmp.eq.s32.totalorder %s10, 0
    %p93 = por %p91, %p92
    %p94 = scmp.ne.s32.totalorder %s86, %s88
    %p95 = scmp.eq.s32.totalorder %s15, 1
    %p96 = por %p94, %p95
    %p97 = scmp.ne.s32.totalorder %s88, %s89
    %p98 = scmp.eq.s32.totalorder %s15, 0
    %p99 = por %p97, %p98
    %p100 = scmp.ne.s32.totalorder %s88, %s89
    %p101 = scmp.eq.s32.totalorder %s16, 1
    %p102 = por %p100, %p101
    %p104 = scmp.ne.s32.totalorder %s89, %s103
    %p105 = scmp.eq.s32.totalorder %s16, 0
    %p106 = por %p104, %p105
    %s107 = ssub.s32 %s10, %s17
    %p108 = scmp.eq.s32.totalorder %s107, 0
    %s110 = sadd.s32 %s109, 1
    %s111 = scalar_select %p108, %s109, %s110
    %p114 = pneg %p108
    %p115 = scmp.eq.s32.totalorder %s10, 1
    %p116 = por %p114, %p115
    %p117 = scmp.ne.s32.totalorder %s109, %s112
    %p118 = scmp.eq.s32.totalorder %s10, 0
    %p119 = por %p117, %p118
    %p120 = scmp.ne.s32.totalorder %s109, %s112
    %p121 = scmp.eq.s32.totalorder %s15, 1
    %p122 = por %p120, %p121
    %p123 = scmp.ne.s32.totalorder %s112, %s113
    %p124 = scmp.eq.s32.totalorder %s15, 0
    %p125 = por %p123, %p124
    %p126 = scmp.ne.s32.totalorder %s112, %s113
    %p127 = scmp.eq.s32.totalorder %s16, 1
    %p128 = por %p126, %p127
    %p130 = scmp.ne.s32.totalorder %s113, %s129
    %p131 = scmp.eq.s32.totalorder %s16, 0
    %p132 = por %p130, %p131
    %p133 = scmp.le.s32.totalorder 1, %s10
    %p134 = scmp.lt.s32.totalorder %s10, 3
    %p135 = pnand %p133, %p134
    %p136 = pneg %p135
    // Predicated region
    $region9: #{tpu_custom_call.1} parent=5 // pred_check
      _
    $region10: #{tpu_custom_call.1} parent=5 // pred_check_branch
      %138 = sbr.rel (%p135) target = $region12
    $region11: #{tpu_custom_call.1} parent=5 // pred_region
      %s139 = ssub.s32 %s10, 1
      // Predicated region
      $region13: #{tpu_custom_call.1} parent=11 // pred_check
        %p140 = pneg %p57
      $region14: #{tpu_custom_call.1} parent=11 // pred_check_branch
        %142 = sbr.rel (%p140) target = $region16
      $region15: #{tpu_custom_call.1} parent=11 // pred_region
        _
      $region16: #{tpu_custom_call.1} parent=11 // pred_fallthru
        _
      // Predicated region
      $region17: #{tpu_custom_call.1} parent=11 // pred_check
        %p143 = pneg %p78
      $region18: #{tpu_custom_call.1} parent=11 // pred_check_branch
        %145 = sbr.rel (%p143) target = $region20
      $region19: #{tpu_custom_call.1} parent=11 // pred_region
        _
      $region20: #{tpu_custom_call.1} parent=11 // pred_fallthru
        _
      // Predicated region
      $region21: #{tpu_custom_call.1} parent=11 // pred_check
        %p146 = pneg %p99
      $region22: #{tpu_custom_call.1} parent=11 // pred_check_branch
        %148 = sbr.rel (%p146) target = $region24
      $region23: #{tpu_custom_call.1} parent=11 // pred_region
        _
      $region24: #{tpu_custom_call.1} parent=11 // pred_fallthru
        _
    $region12: #{tpu_custom_call.1} parent=5 // pred_fallthru
      _
    %p149 = scmp.lt.s32.totalorder %s10, 2
    // Predicated region
    $region25: #{tpu_custom_call.1} parent=5 // pred_check
      %p150 = pneg %p149
    $region26: #{tpu_custom_call.1} parent=5 // pred_check_branch
      %152 = sbr.rel (%p150) target = $region28
    $region27: #{tpu_custom_call.1} parent=5 // pred_region
      // Predicated region
      $region29: #{tpu_custom_call.1} parent=27 // pred_check
        %p153 = pneg %p30
      $region30: #{tpu_custom_call.1} parent=27 // pred_check_branch
        %155 = sbr.rel (%p153) target = $region32
      $region31: #{tpu_custom_call.1} parent=27 // pred_region
        %s156 = smul.u32 4, %s10
        %p157 = scmp.lt.s32.totalorder %s156, 7
        %s158 = scalar_select %p157, %s156, 7
        %s159 = smul.addr %s158, 18
        %s160 = smul.addr %s159, 4
        %s161 = scalar_lea.vmem %s0, %s160
        %s162 = smul.u32 4, %s10
      $region32: #{tpu_custom_call.1} parent=27 // pred_fallthru
        _
    $region28: #{tpu_custom_call.1} parent=5 // pred_fallthru
      _
    %p163 = scmp.le.s32.totalorder 1, %s10
    %p164 = scmp.lt.s32.totalorder %s10, 3
    %p165 = pnand %p163, %p164
    %p166 = pneg %p165
    // Predicated region
    $region33: #{tpu_custom_call.1} parent=5 // pred_check
      _
    $region34: #{tpu_custom_call.1} parent=5 // pred_check_branch
      %168 = sbr.rel (%p165) target = $region36
    $region35: #{tpu_custom_call.1} parent=5 // pred_region
      %s169 = ssub.s32 %s10, 1
      %s170 = smul.u32 4, %s15
      %p171 = scmp.lt.s32.totalorder %s170, 7
      %s172 = scalar_select %p171, %s170, 7
      %s173 = smul.addr %s172, 18
      %s174 = smul.addr %s173, 4
      %s175 = scalar_lea.vmem %s0, %s174
      %p176 = pneg %p36
      %p177 = pneg %p33
      %p178 = pneg %p57
      %p179 = pneg %p54
      %p180 = pneg %p78
      %p181 = pneg %p75
      %p182 = pneg %p99
      %p183 = pneg %p96
      %p184 = pneg %p125
      %p185 = pneg %p122
      %p186 = scmp.lt.s32.totalorder %s15, 1
      %s187 = scalar_select %p186, %s15, 1
      %s188 = smul.addr %s187, 8
      %s189 = smul.addr %s188, 4
      %s190 = scalar_lea.vmem %s4, %s189
      %s191 = smul.u32 4, %s15
      %p192 = scmp.lt.s32.totalorder %s191, 7
      %s193 = scalar_select %p192, %s191, 7
      %s194 = smul.addr %s193, 18
      %s195 = smul.addr %s194, 4
      %s196 = scalar_lea.vmem %s0, %s195
      %s197 = smul.u32 4, %s15
      %p198 = scmp.lt.s32.totalorder %s15, 1
      %s199 = scalar_select %p198, %s15, 1
      %s200 = smul.addr %s199, 8
      %s201 = smul.addr %s200, 4
      %s202 = scalar_lea.vmem %s4, %s201
      %v204 = vld [vmem:[%s196] sm:$0xf]
      %v205 = vld [vmem:[%s196 + $0x8] sm:$0xf]
      %v206 = vld [vmem:[%s196 + $0x10] sm:$0xf]
      %v207 = vld [vmem:[%s196 + $0x18] sm:$0xf]
      %v208 = vld [vmem:[%s196 + $0x20] sm:$0xf]
      %v209 = vld [vmem:[%s196 + $0x28] sm:$0xf]
      %v210 = vld [vmem:[%s196 + $0x30] sm:$0xf]
      %v211 = vld [vmem:[%s196 + $0x38] sm:$0xf]
      %v212 = vld [vmem:[%s1] sm:$0x3]
      %s213 = scalar_lea.vmem %s196, 72
      %v214 = vld [vmem:[%s213] sm:$0xf]
      %v215 = vld [vmem:[%s213 + $0x8] sm:$0xf]
      %v216 = vld [vmem:[%s213 + $0x10] sm:$0xf]
      %v217 = vld [vmem:[%s213 + $0x18] sm:$0xf]
      %v218 = vld [vmem:[%s213 + $0x20] sm:$0xf]
      %v219 = vld [vmem:[%s213 + $0x28] sm:$0xf]
      %v220 = vld [vmem:[%s213 + $0x30] sm:$0xf]
      %v221 = vld [vmem:[%s213 + $0x38] sm:$0xf]
      %s222 = scalar_lea.vmem %s1, 2
      %v223 = vld [vmem:[%s222] sm:$0x3]
      %v232 = vunpack.c.l.b16 %v214
      %v233 = vunpack.c.l.b16 %v215
      %v234 = vunpack.c.l.b16 %v216
      %v235 = vunpack.c.l.b16 %v217
      %v236 = vunpack.c.l.b16 %v218
      %v237 = vunpack.c.l.b16 %v219
      %v238 = vunpack.c.l.b16 %v220
      %v239 = vunpack.c.l.b16 %v221
      %v240 = vpack.c.b16 %v233, %v232
      %v241 = vpack.c.b16 %v235, %v234
      %v242 = vpack.c.b16 %v237, %v236
      %v243 = vpack.c.b16 %v239, %v238
      %vm244 = vcmask 31744
      %v246 = vsel %vm244, %v240, 0
      %v249 = vsel %vm244, %v241, 0
      %v252 = vsel %vm244, %v242, 0
      %v255 = vsel %vm244, %v243, 0
      %vm257 = vcmask 1041408
      %v259 = vsel %vm257, %v223, 0
      %261 = vmatpush.bf16.msra.mxu0 0
      %262 = vmatpush.bf16.msra.mxu0 0
      %263 = vmatpush.bf16.msra.mxu0 0
      %264 = vmatpush.bf16.msra.mxu0 0
      %265 = vmatpush.bf16.msra.mxu0 0
      %266 = vmatpush.bf16.msra.mxu0 0
      %267 = vmatpush.bf16.msra.mxu0 0
      %268 = vmatpush.bf16.msra.mxu0 %v259
      %269 = vmatmul.bf16.gmra.mxu0 %v246
      %v270 = vpop.f32.mrf.mxu0
      %v271 = vadd.f32 0.0, %v270
      %v272 = vpop.f32.mrf.mxu0
      %v273 = vadd.f32 0.0, %v272
      %274 = vmatmul.bf16.gmra.mxu0 %v249
      %v275 = vpop.f32.mrf.mxu0
      %v276 = vadd.f32 0.0, %v275
      %v277 = vpop.f32.mrf.mxu0
      %v278 = vadd.f32 0.0, %v277
      %279 = vmatmul.bf16.gmra.mxu0 %v252
      %v280 = vpop.f32.mrf.mxu0
      %v281 = vadd.f32 0.0, %v280
      %v282 = vpop.f32.mrf.mxu0
      %v283 = vadd.f32 0.0, %v282
      %284 = vmatmul.bf16.gmra.mxu0 %v255
      %v285 = vpop.f32.mrf.mxu0
      %v286 = vadd.f32 0.0, %v285
      %v287 = vpop.f32.mrf.mxu0
      %v288 = vadd.f32 0.0, %v287
      %289 = vdwg.mxu0
      %v298 = vunpack.c.l.b16 %v204
      %v299 = vunpack.c.l.b16 %v205
      %v300 = vunpack.c.l.b16 %v206
      %v301 = vunpack.c.l.b16 %v207
      %v302 = vunpack.c.l.b16 %v208
      %v303 = vunpack.c.l.b16 %v209
      %v304 = vunpack.c.l.b16 %v210
      %v305 = vunpack.c.l.b16 %v211
      %v306 = vpack.c.b16 %v299, %v298
      %v307 = vpack.c.b16 %v301, %v300
      %v308 = vpack.c.b16 %v303, %v302
      %v309 = vpack.c.b16 %v305, %v304
      %v311 = vsel %vm244, %v306, 0
      %v314 = vsel %vm244, %v307, 0
      %v317 = vsel %vm244, %v308, 0
      %v320 = vsel %vm244, %v309, 0
      %v323 = vsel %vm257, %v212, 0
      %325 = vmatpush.bf16.msra.mxu0 0
      %326 = vmatpush.bf16.msra.mxu0 0
      %327 = vmatpush.bf16.msra.mxu0 0
      %328 = vmatpush.bf16.msra.mxu0 0
      %329 = vmatpush.bf16.msra.mxu0 0
      %330 = vmatpush.bf16.msra.mxu0 0
      %331 = vmatpush.bf16.msra.mxu0 0
      %332 = vmatpush.bf16.msra.mxu0 %v323
      %333 = vmatmul.bf16.gmra.mxu0 %v311
      %v334 = vpop.f32.mrf.mxu0
      %v335 = vadd.f32 %v271, %v334
      %v336 = vpop.f32.mrf.mxu0
      %v337 = vadd.f32 %v273, %v336
      %338 = vmatmul.bf16.gmra.mxu0 %v314
      %v339 = vpop.f32.mrf.mxu0
      %v340 = vadd.f32 %v276, %v339
      %v341 = vpop.f32.mrf.mxu0
      %v342 = vadd.f32 %v278, %v341
      %343 = vmatmul.bf16.gmra.mxu0 %v317
      %v344 = vpop.f32.mrf.mxu0
      %v345 = vadd.f32 %v281, %v344
      %v346 = vpop.f32.mrf.mxu0
      %v347 = vadd.f32 %v283, %v346
      %348 = vmatmul.bf16.gmra.mxu0 %v320
      %v349 = vpop.f32.mrf.mxu0
      %v350 = vadd.f32 %v286, %v349
      %v351 = vpop.f32.mrf.mxu0
      %v352 = vadd.f32 %v288, %v351
      %353 = vdwg.mxu0
      %v354 = vld [vmem:[%s196] sm:$0xf]
      %v355 = vld [vmem:[%s196 + $0x4] sm:$0x1]
      %v356 = vld [vmem:[%s196 + $0x8] sm:$0xf]
      %v357 = vld [vmem:[%s196 + $0xc] sm:$0x1]
      %v358 = vld [vmem:[%s196 + $0x10] sm:$0xf]
      %v359 = vld [vmem:[%s196 + $0x14] sm:$0x1]
      %v360 = vld [vmem:[%s196 + $0x18] sm:$0xf]
      %v361 = vld [vmem:[%s196 + $0x1c] sm:$0x1]
      %v362 = vld [vmem:[%s196 + $0x20] sm:$0xf]
      %v363 = vld [vmem:[%s196 + $0x24] sm:$0x1]
      %v364 = vld [vmem:[%s196 + $0x28] sm:$0xf]
      %v365 = vld [vmem:[%s196 + $0x2c] sm:$0x1]
      %v366 = vld [vmem:[%s196 + $0x30] sm:$0xf]
      %v367 = vld [vmem:[%s196 + $0x34] sm:$0x1]
      %v368 = vld [vmem:[%s196 + $0x38] sm:$0xf]
      %v369 = vld [vmem:[%s196 + $0x3c] sm:$0x1]
      %vm370 = vsmask.f32 3328
      %vm371 = vsmask.f32 7440
      %vm372 = vmor %vm370, %vm371
      %v374 = vshrl.u32 %v354, 16
      %v376 = vrot.slane %v374, 4
      %v377 = vshll.u32 %v354, 16
      %v379 = vrot.slane %v377, 5
      %v380 = vor.u32 %v376, %v379
      %v381 = vrot.slane %v380, 4
      %v383 = vshll.u32 %v355, 16
      %v385 = vrot.slane %v383, 5
      %v386 = vsel %vm372, %v381, %v385
      %v388 = vshrl.u32 %v356, 16
      %v390 = vrot.slane %v388, 4
      %v391 = vshll.u32 %v356, 16
      %v393 = vrot.slane %v391, 5
      %v394 = vor.u32 %v390, %v393
      %v395 = vrot.slane %v394, 4
      %v397 = vshll.u32 %v357, 16
      %v399 = vrot.slane %v397, 5
      %v400 = vsel %vm372, %v395, %v399
      %v402 = vshrl.u32 %v358, 16
      %v404 = vrot.slane %v402, 4
      %v405 = vshll.u32 %v358, 16
      %v407 = vrot.slane %v405, 5
      %v408 = vor.u32 %v404, %v407
      %v409 = vrot.slane %v408, 4
      %v411 = vshll.u32 %v359, 16
      %v413 = vrot.slane %v411, 5
      %v414 = vsel %vm372, %v409, %v413
      %v416 = vshrl.u32 %v360, 16
      %v418 = vrot.slane %v416, 4
      %v419 = vshll.u32 %v360, 16
      %v421 = vrot.slane %v419, 5
      %v422 = vor.u32 %v418, %v421
      %v423 = vrot.slane %v422, 4
      %v425 = vshll.u32 %v361, 16
      %v427 = vrot.slane %v425, 5
      %v428 = vsel %vm372, %v423, %v427
      %v430 = vshrl.u32 %v362, 16
      %v432 = vrot.slane %v430, 4
      %v433 = vshll.u32 %v362, 16
      %v435 = vrot.slane %v433, 5
      %v436 = vor.u32 %v432, %v435
      %v437 = vrot.slane %v436, 4
      %v439 = vshll.u32 %v363, 16
      %v441 = vrot.slane %v439, 5
      %v442 = vsel %vm372, %v437, %v441
      %v444 = vshrl.u32 %v364, 16
      %v446 = vrot.slane %v444, 4
      %v447 = vshll.u32 %v364, 16
      %v449 = vrot.slane %v447, 5
      %v450 = vor.u32 %v446, %v449
      %v451 = vrot.slane %v450, 4
      %v453 = vshll.u32 %v365, 16
      %v455 = vrot.slane %v453, 5
      %v456 = vsel %vm372, %v451, %v455
      %v458 = vshrl.u32 %v366, 16
      %v460 = vrot.slane %v458, 4
      %v461 = vshll.u32 %v366, 16
      %v463 = vrot.slane %v461, 5
      %v464 = vor.u32 %v460, %v463
      %v465 = vrot.slane %v464, 4
      %v467 = vshll.u32 %v367, 16
      %v469 = vrot.slane %v467, 5
      %v470 = vsel %vm372, %v465, %v469
      %v472 = vshrl.u32 %v368, 16
      %v474 = vrot.slane %v472, 4
      %v475 = vshll.u32 %v368, 16
      %v477 = vrot.slane %v475, 5
      %v478 = vor.u32 %v474, %v477
      %v479 = vrot.slane %v478, 4
      %v481 = vshll.u32 %v369, 16
      %v483 = vrot.slane %v481, 5
      %v484 = vsel %vm372, %v479, %v483
      %s485 = scalar_lea.vmem %s1, 4
      %v486 = vld [vmem:[%s485] sm:$0x3]
      %v487 = vunpack.c.l.b16 %v386
      %v488 = vunpack.c.l.b16 %v400
      %v489 = vunpack.c.l.b16 %v414
      %v490 = vunpack.c.l.b16 %v428
      %v491 = vunpack.c.l.b16 %v442
      %v492 = vunpack.c.l.b16 %v456
      %v493 = vunpack.c.l.b16 %v470
      %v494 = vunpack.c.l.b16 %v484
      %v495 = vpack.c.b16 %v488, %v487
      %v496 = vpack.c.b16 %v490, %v489
      %v497 = vpack.c.b16 %v492, %v491
      %v498 = vpack.c.b16 %v494, %v493
      %v500 = vsel %vm244, %v495, 0
      %v503 = vsel %vm244, %v496, 0
      %v506 = vsel %vm244, %v497, 0
      %v509 = vsel %vm244, %v498, 0
      %v512 = vsel %vm257, %v486, 0
      %514 = vmatpush.bf16.msra.mxu0 0
      %515 = vmatpush.bf16.msra.mxu0 0
      %516 = vmatpush.bf16.msra.mxu0 0
      %517 = vmatpush.bf16.msra.mxu0 0
      %518 = vmatpush.bf16.msra.mxu0 0
      %519 = vmatpush.bf16.msra.mxu0 0
      %520 = vmatpush.bf16.msra.mxu0 0
      %521 = vmatpush.bf16.msra.mxu0 %v512
      %522 = vmatmul.bf16.gmra.mxu0 %v500
      %v523 = vpop.f32.mrf.mxu0
      %v524 = vadd.f32 0.0, %v523
      %v525 = vpop.f32.mrf.mxu0
      %v526 = vadd.f32 0.0, %v525
      %527 = vmatmul.bf16.gmra.mxu0 %v503
      %v528 = vpop.f32.mrf.mxu0
      %v529 = vadd.f32 0.0, %v528
      %v530 = vpop.f32.mrf.mxu0
      %v531 = vadd.f32 0.0, %v530
      %532 = vmatmul.bf16.gmra.mxu0 %v506
      %v533 = vpop.f32.mrf.mxu0
      %v534 = vadd.f32 0.0, %v533
      %v535 = vpop.f32.mrf.mxu0
      %v536 = vadd.f32 0.0, %v535
      %537 = vmatmul.bf16.gmra.mxu0 %v509
      %v538 = vpop.f32.mrf.mxu0
      %v539 = vadd.f32 0.0, %v538
      %v540 = vpop.f32.mrf.mxu0
      %v541 = vadd.f32 0.0, %v540
      %542 = vdwg.mxu0
      %v543 = vadd.f32 %v335, %v524
      %v544 = vadd.f32 %v337, %v526
      %v545 = vadd.f32 %v340, %v529
      %v546 = vadd.f32 %v342, %v531
      %v547 = vadd.f32 %v345, %v534
      %v548 = vadd.f32 %v347, %v536
      %v549 = vadd.f32 %v350, %v539
      %v550 = vadd.f32 %v352, %v541
      %s551 = scalar_lea.vmem %s196, 144
      %v552 = vld [vmem:[%s551] sm:$0xf]
      %v553 = vld [vmem:[%s551 + $0x8] sm:$0xf]
      %v554 = vld [vmem:[%s551 + $0x10] sm:$0xf]
      %v555 = vld [vmem:[%s551 + $0x18] sm:$0xf]
      %v556 = vld [vmem:[%s551 + $0x20] sm:$0xf]
      %v557 = vld [vmem:[%s551 + $0x28] sm:$0xf]
      %v558 = vld [vmem:[%s551 + $0x30] sm:$0xf]
      %v559 = vld [vmem:[%s551 + $0x38] sm:$0xf]
      %s560 = scalar_lea.vmem %s1, 6
      %v561 = vld [vmem:[%s560] sm:$0x3]
      %v570 = vunpack.c.l.b16 %v552
      %v571 = vunpack.c.l.b16 %v553
      %v572 = vunpack.c.l.b16 %v554
      %v573 = vunpack.c.l.b16 %v555
      %v574 = vunpack.c.l.b16 %v556
      %v575 = vunpack.c.l.b16 %v557
      %v576 = vunpack.c.l.b16 %v558
      %v577 = vunpack.c.l.b16 %v559
      %v578 = vpack.c.b16 %v571, %v570
      %v579 = vpack.c.b16 %v573, %v572
      %v580 = vpack.c.b16 %v575, %v574
      %v581 = vpack.c.b16 %v577, %v576
      %v583 = vsel %vm244, %v578, 0
      %v586 = vsel %vm244, %v579, 0
      %v589 = vsel %vm244, %v580, 0
      %v592 = vsel %vm244, %v581, 0
      %v595 = vsel %vm257, %v561, 0
      %597 = vmatpush.bf16.msra.mxu0 0
      %598 = vmatpush.bf16.msra.mxu0 0
      %599 = vmatpush.bf16.msra.mxu0 0
      %600 = vmatpush.bf16.msra.mxu0 0
      %601 = vmatpush.bf16.msra.mxu0 0
      %602 = vmatpush.bf16.msra.mxu0 0
      %603 = vmatpush.bf16.msra.mxu0 0
      %604 = vmatpush.bf16.msra.mxu0 %v595
      %605 = vmatmul.bf16.gmra.mxu0 %v583
      %v606 = vpop.f32.mrf.mxu0
      %v607 = vadd.f32 0.0, %v606
      %v608 = vpop.f32.mrf.mxu0
      %v609 = vadd.f32 0.0, %v608
      %610 = vmatmul.bf16.gmra.mxu0 %v586
      %v611 = vpop.f32.mrf.mxu0
      %v612 = vadd.f32 0.0, %v611
      %v613 = vpop.f32.mrf.mxu0
      %v614 = vadd.f32 0.0, %v613
      %615 = vmatmul.bf16.gmra.mxu0 %v589
      %v616 = vpop.f32.mrf.mxu0
      %v617 = vadd.f32 0.0, %v616
      %v618 = vpop.f32.mrf.mxu0
      %v619 = vadd.f32 0.0, %v618
      %620 = vmatmul.bf16.gmra.mxu0 %v592
      %v621 = vpop.f32.mrf.mxu0
      %v622 = vadd.f32 0.0, %v621
      %v623 = vpop.f32.mrf.mxu0
      %v624 = vadd.f32 0.0, %v623
      %625 = vdwg.mxu0
      %v626 = vadd.f32 %v543, %v607
      %v627 = vadd.f32 %v544, %v609
      %v628 = vadd.f32 %v545, %v612
      %v629 = vadd.f32 %v546, %v614
      %v630 = vadd.f32 %v547, %v617
      %v631 = vadd.f32 %v548, %v619
      %v632 = vadd.f32 %v549, %v622
      %v633 = vadd.f32 %v550, %v624
      %s634 = scalar_lea.vmem %s196, 216
      %v635 = vld [vmem:[%s634] sm:$0xf]
      %v636 = vld [vmem:[%s634 + $0x8] sm:$0xf]
      %v637 = vld [vmem:[%s634 + $0x10] sm:$0xf]
      %v638 = vld [vmem:[%s634 + $0x18] sm:$0xf]
      %v639 = vld [vmem:[%s634 + $0x20] sm:$0xf]
      %v640 = vld [vmem:[%s634 + $0x28] sm:$0xf]
      %v641 = vld [vmem:[%s634 + $0x30] sm:$0xf]
      %v642 = vld [vmem:[%s634 + $0x38] sm:$0xf]
      %s643 = scalar_lea.vmem %s1, 8
      %v644 = vld [vmem:[%s643] sm:$0x3]
      %v653 = vunpack.c.l.b16 %v635
      %v654 = vunpack.c.l.b16 %v636
      %v655 = vunpack.c.l.b16 %v637
      %v656 = vunpack.c.l.b16 %v638
      %v657 = vunpack.c.l.b16 %v639
      %v658 = vunpack.c.l.b16 %v640
      %v659 = vunpack.c.l.b16 %v641
      %v660 = vunpack.c.l.b16 %v642
      %v661 = vpack.c.b16 %v654, %v653
      %v662 = vpack.c.b16 %v656, %v655
      %v663 = vpack.c.b16 %v658, %v657
      %v664 = vpack.c.b16 %v660, %v659
      %v666 = vsel %vm244, %v661, 0
      %v669 = vsel %vm244, %v662, 0
      %v672 = vsel %vm244, %v663, 0
      %v675 = vsel %vm244, %v664, 0
      %v678 = vsel %vm257, %v644, 0
      %680 = vmatpush.bf16.msra.mxu0 0
      %681 = vmatpush.bf16.msra.mxu0 0
      %682 = vmatpush.bf16.msra.mxu0 0
      %683 = vmatpush.bf16.msra.mxu0 0
      %684 = vmatpush.bf16.msra.mxu0 0
      %685 = vmatpush.bf16.msra.mxu0 0
      %686 = vmatpush.bf16.msra.mxu0 0
      %687 = vmatpush.bf16.msra.mxu0 %v678
      %688 = vmatmul.bf16.gmra.mxu0 %v666
      %v689 = vpop.f32.mrf.mxu0
      %v690 = vadd.f32 0.0, %v689
      %v691 = vpop.f32.mrf.mxu0
      %v692 = vadd.f32 0.0, %v691
      %693 = vmatmul.bf16.gmra.mxu0 %v669
      %v694 = vpop.f32.mrf.mxu0
      %v695 = vadd.f32 0.0, %v694
      %v696 = vpop.f32.mrf.mxu0
      %v697 = vadd.f32 0.0, %v696
      %698 = vmatmul.bf16.gmra.mxu0 %v672
      %v699 = vpop.f32.mrf.mxu0
      %v700 = vadd.f32 0.0, %v699
      %v701 = vpop.f32.mrf.mxu0
      %v702 = vadd.f32 0.0, %v701
      %703 = vmatmul.bf16.gmra.mxu0 %v675
      %v704 = vpop.f32.mrf.mxu0
      %v705 = vadd.f32 0.0, %v704
      %v706 = vpop.f32.mrf.mxu0
      %v707 = vadd.f32 0.0, %v706
      %708 = vdwg.mxu0
      %v709 = vadd.f32 %v626, %v690
      %v710 = vadd.f32 %v627, %v692
      %v711 = vadd.f32 %v628, %v695
      %v712 = vadd.f32 %v629, %v697
      %v713 = vadd.f32 %v630, %v700
      %v714 = vadd.f32 %v631, %v702
      %v715 = vadd.f32 %v632, %v705
      %v716 = vadd.f32 %v633, %v707
      %v717 = vld [vmem:[%s551] sm:$0xf]
      %v718 = vld [vmem:[%s551 + $0x4] sm:$0x1]
      %v719 = vld [vmem:[%s551 + $0x8] sm:$0xf]
      %v720 = vld [vmem:[%s551 + $0xc] sm:$0x1]
      %v721 = vld [vmem:[%s551 + $0x10] sm:$0xf]
      %v722 = vld [vmem:[%s551 + $0x14] sm:$0x1]
      %v723 = vld [vmem:[%s551 + $0x18] sm:$0xf]
      %v724 = vld [vmem:[%s551 + $0x1c] sm:$0x1]
      %v725 = vld [vmem:[%s551 + $0x20] sm:$0xf]
      %v726 = vld [vmem:[%s551 + $0x24] sm:$0x1]
      %v727 = vld [vmem:[%s551 + $0x28] sm:$0xf]
      %v728 = vld [vmem:[%s551 + $0x2c] sm:$0x1]
      %v729 = vld [vmem:[%s551 + $0x30] sm:$0xf]
      %v730 = vld [vmem:[%s551 + $0x34] sm:$0x1]
      %v731 = vld [vmem:[%s551 + $0x38] sm:$0xf]
      %v732 = vld [vmem:[%s551 + $0x3c] sm:$0x1]
      %v734 = vshrl.u32 %v717, 16
      %v736 = vrot.slane %v734, 4
      %v737 = vshll.u32 %v717, 16
      %v739 = vrot.slane %v737, 5
      %v740 = vor.u32 %v736, %v739
      %v741 = vrot.slane %v740, 4
      %v743 = vshll.u32 %v718, 16
      %v745 = vrot.slane %v743, 5
      %v746 = vsel %vm372, %v741, %v745
      %v748 = vshrl.u32 %v719, 16
      %v750 = vrot.slane %v748, 4
      %v751 = vshll.u32 %v719, 16
      %v753 = vrot.slane %v751, 5
      %v754 = vor.u32 %v750, %v753
      %v755 = vrot.slane %v754, 4
      %v757 = vshll.u32 %v720, 16
      %v759 = vrot.slane %v757, 5
      %v760 = vsel %vm372, %v755, %v759
      %v762 = vshrl.u32 %v721, 16
      %v764 = vrot.slane %v762, 4
      %v765 = vshll.u32 %v721, 16
      %v767 = vrot.slane %v765, 5
      %v768 = vor.u32 %v764, %v767
      %v769 = vrot.slane %v768, 4
      %v771 = vshll.u32 %v722, 16
      %v773 = vrot.slane %v771, 5
      %v774 = vsel %vm372, %v769, %v773
      %v776 = vshrl.u32 %v723, 16
      %v778 = vrot.slane %v776, 4
      %v779 = vshll.u32 %v723, 16
      %v781 = vrot.slane %v779, 5
      %v782 = vor.u32 %v778, %v781
      %v783 = vrot.slane %v782, 4
      %v785 = vshll.u32 %v724, 16
      %v787 = vrot.slane %v785, 5
      %v788 = vsel %vm372, %v783, %v787
      %v790 = vshrl.u32 %v725, 16
      %v792 = vrot.slane %v790, 4
      %v793 = vshll.u32 %v725, 16
      %v795 = vrot.slane %v793, 5
      %v796 = vor.u32 %v792, %v795
      %v797 = vrot.slane %v796, 4
      %v799 = vshll.u32 %v726, 16
      %v801 = vrot.slane %v799, 5
      %v802 = vsel %vm372, %v797, %v801
      %v804 = vshrl.u32 %v727, 16
      %v806 = vrot.slane %v804, 4
      %v807 = vshll.u32 %v727, 16
      %v809 = vrot.slane %v807, 5
      %v810 = vor.u32 %v806, %v809
      %v811 = vrot.slane %v810, 4
      %v813 = vshll.u32 %v728, 16
      %v815 = vrot.slane %v813, 5
      %v816 = vsel %vm372, %v811, %v815
      %v818 = vshrl.u32 %v729, 16
      %v820 = vrot.slane %v818, 4
      %v821 = vshll.u32 %v729, 16
      %v823 = vrot.slane %v821, 5
      %v824 = vor.u32 %v820, %v823
      %v825 = vrot.slane %v824, 4
      %v827 = vshll.u32 %v730, 16
      %v829 = vrot.slane %v827, 5
      %v830 = vsel %vm372, %v825, %v829
      %v832 = vshrl.u32 %v731, 16
      %v834 = vrot.slane %v832, 4
      %v835 = vshll.u32 %v731, 16
      %v837 = vrot.slane %v835, 5
      %v838 = vor.u32 %v834, %v837
      %v839 = vrot.slane %v838, 4
      %v841 = vshll.u32 %v732, 16
      %v843 = vrot.slane %v841, 5
      %v844 = vsel %vm372, %v839, %v843
      %s845 = scalar_lea.vmem %s1, 10
      %v846 = vld [vmem:[%s845] sm:$0x3]
      %v847 = vunpack.c.l.b16 %v746
      %v848 = vunpack.c.l.b16 %v760
      %v849 = vunpack.c.l.b16 %v774
      %v850 = vunpack.c.l.b16 %v788
      %v851 = vunpack.c.l.b16 %v802
      %v852 = vunpack.c.l.b16 %v816
      %v853 = vunpack.c.l.b16 %v830
      %v854 = vunpack.c.l.b16 %v844
      %v855 = vpack.c.b16 %v848, %v847
      %v856 = vpack.c.b16 %v850, %v849
      %v857 = vpack.c.b16 %v852, %v851
      %v858 = vpack.c.b16 %v854, %v853
      %v860 = vsel %vm244, %v855, 0
      %v863 = vsel %vm244, %v856, 0
      %v866 = vsel %vm244, %v857, 0
      %v869 = vsel %vm244, %v858, 0
      %v872 = vsel %vm257, %v846, 0
      %874 = vmatpush.bf16.msra.mxu0 0
      %875 = vmatpush.bf16.msra.mxu0 0
      %876 = vmatpush.bf16.msra.mxu0 0
      %877 = vmatpush.bf16.msra.mxu0 0
      %878 = vmatpush.bf16.msra.mxu0 0
      %879 = vmatpush.bf16.msra.mxu0 0
      %880 = vmatpush.bf16.msra.mxu0 0
      %881 = vmatpush.bf16.msra.mxu0 %v872
      %882 = vmatmul.bf16.gmra.mxu0 %v860
      %v883 = vpop.f32.mrf.mxu0
      %v884 = vadd.f32 0.0, %v883
      %v885 = vpop.f32.mrf.mxu0
      %v886 = vadd.f32 0.0, %v885
      %887 = vmatmul.bf16.gmra.mxu0 %v863
      %v888 = vpop.f32.mrf.mxu0
      %v889 = vadd.f32 0.0, %v888
      %v890 = vpop.f32.mrf.mxu0
      %v891 = vadd.f32 0.0, %v890
      %892 = vmatmul.bf16.gmra.mxu0 %v866
      %v893 = vpop.f32.mrf.mxu0
      %v894 = vadd.f32 0.0, %v893
      %v895 = vpop.f32.mrf.mxu0
      %v896 = vadd.f32 0.0, %v895
      %897 = vmatmul.bf16.gmra.mxu0 %v869
      %v898 = vpop.f32.mrf.mxu0
      %v899 = vadd.f32 0.0, %v898
      %v900 = vpop.f32.mrf.mxu0
      %v901 = vadd.f32 0.0, %v900
      %902 = vdwg.mxu0
      %v903 = vadd.f32 %v709, %v884
      %v904 = vadd.f32 %v710, %v886
      %v905 = vadd.f32 %v711, %v889
      %v906 = vadd.f32 %v712, %v891
      %v907 = vadd.f32 %v713, %v894
      %v908 = vadd.f32 %v714, %v896
      %v909 = vadd.f32 %v715, %v899
      %v910 = vadd.f32 %v716, %v901
      %s911 = scalar_lea.vmem %s196, 8
      %v912 = vld [vmem:[%s911] sm:$0xf]
      %v913 = vld [vmem:[%s911 + $0x8] sm:$0xf]
      %v914 = vld [vmem:[%s911 + $0x10] sm:$0xf]
      %v915 = vld [vmem:[%s911 + $0x18] sm:$0xf]
      %v916 = vld [vmem:[%s911 + $0x20] sm:$0xf]
      %v917 = vld [vmem:[%s911 + $0x28] sm:$0xf]
      %v918 = vld [vmem:[%s911 + $0x30] sm:$0xf]
      %v919 = vld [vmem:[%s911 + $0x38] sm:$0xf]
      %s920 = scalar_lea.vmem %s1, 12
      %v921 = vld [vmem:[%s920] sm:$0x3]
      %v930 = vunpack.c.l.b16 %v912
      %v931 = vunpack.c.l.b16 %v913
      %v932 = vunpack.c.l.b16 %v914
      %v933 = vunpack.c.l.b16 %v915
      %v934 = vunpack.c.l.b16 %v916
      %v935 = vunpack.c.l.b16 %v917
      %v936 = vunpack.c.l.b16 %v918
      %v937 = vunpack.c.l.b16 %v919
      %v938 = vpack.c.b16 %v931, %v930
      %v939 = vpack.c.b16 %v933, %v932
      %v940 = vpack.c.b16 %v935, %v934
      %v941 = vpack.c.b16 %v937, %v936
      %v943 = vsel %vm244, %v938, 0
      %v946 = vsel %vm244, %v939, 0
      %v949 = vsel %vm244, %v940, 0
      %v952 = vsel %vm244, %v941, 0
      %v955 = vsel %vm257, %v921, 0
      %957 = vmatpush.bf16.msra.mxu0 0
      %958 = vmatpush.bf16.msra.mxu0 0
      %959 = vmatpush.bf16.msra.mxu0 0
      %960 = vmatpush.bf16.msra.mxu0 0
      %961 = vmatpush.bf16.msra.mxu0 0
      %962 = vmatpush.bf16.msra.mxu0 0
      %963 = vmatpush.bf16.msra.mxu0 0
      %964 = vmatpush.bf16.msra.mxu0 %v955
      %965 = vmatmul.bf16.gmra.mxu0 %v943
      %v966 = vpop.f32.mrf.mxu0
      %v967 = vadd.f32 0.0, %v966
      %v968 = vpop.f32.mrf.mxu0
      %v969 = vadd.f32 0.0, %v968
      %970 = vmatmul.bf16.gmra.mxu0 %v946
      %v971 = vpop.f32.mrf.mxu0
      %v972 = vadd.f32 0.0, %v971
      %v973 = vpop.f32.mrf.mxu0
      %v974 = vadd.f32 0.0, %v973
      %975 = vmatmul.bf16.gmra.mxu0 %v949
      %v976 = vpop.f32.mrf.mxu0
      %v977 = vadd.f32 0.0, %v976
      %v978 = vpop.f32.mrf.mxu0
      %v979 = vadd.f32 0.0, %v978
      %980 = vmatmul.bf16.gmra.mxu0 %v952
      %v981 = vpop.f32.mrf.mxu0
      %v982 = vadd.f32 0.0, %v981
      %v983 = vpop.f32.mrf.mxu0
      %v984 = vadd.f32 0.0, %v983
      %985 = vdwg.mxu0
      %v986 = vadd.f32 %v903, %v967
      %v987 = vadd.f32 %v904, %v969
      %v988 = vadd.f32 %v905, %v972
      %v989 = vadd.f32 %v906, %v974
      %v990 = vadd.f32 %v907, %v977
      %v991 = vadd.f32 %v908, %v979
      %v992 = vadd.f32 %v909, %v982
      %v993 = vadd.f32 %v910, %v984
      %s994 = scalar_lea.vmem %s196, 80
      %v995 = vld [vmem:[%s994] sm:$0xf]
      %v996 = vld [vmem:[%s994 + $0x8] sm:$0xf]
      %v997 = vld [vmem:[%s994 + $0x10] sm:$0xf]
      %v998 = vld [vmem:[%s994 + $0x18] sm:$0xf]
      %v999 = vld [vmem:[%s994 + $0x20] sm:$0xf]
      %v1000 = vld [vmem:[%s994 + $0x28] sm:$0xf]
      %v1001 = vld [vmem:[%s994 + $0x30] sm:$0xf]
      %v1002 = vld [vmem:[%s994 + $0x38] sm:$0xf]
      %s1003 = scalar_lea.vmem %s1, 14
      %v1004 = vld [vmem:[%s1003] sm:$0x3]
      %v1013 = vunpack.c.l.b16 %v995
      %v1014 = vunpack.c.l.b16 %v996
      %v1015 = vunpack.c.l.b16 %v997
      %v1016 = vunpack.c.l.b16 %v998
      %v1017 = vunpack.c.l.b16 %v999
      %v1018 = vunpack.c.l.b16 %v1000
      %v1019 = vunpack.c.l.b16 %v1001
      %v1020 = vunpack.c.l.b16 %v1002
      %v1021 = vpack.c.b16 %v1014, %v1013
      %v1022 = vpack.c.b16 %v1016, %v1015
      %v1023 = vpack.c.b16 %v1018, %v1017
      %v1024 = vpack.c.b16 %v1020, %v1019
      %v1026 = vsel %vm244, %v1021, 0
      %v1029 = vsel %vm244, %v1022, 0
      %v1032 = vsel %vm244, %v1023, 0
      %v1035 = vsel %vm244, %v1024, 0
      %v1038 = vsel %vm257, %v1004, 0
      %1040 = vmatpush.bf16.msra.mxu0 0
      %1041 = vmatpush.bf16.msra.mxu0 0
      %1042 = vmatpush.bf16.msra.mxu0 0
      %1043 = vmatpush.bf16.msra.mxu0 0
      %1044 = vmatpush.bf16.msra.mxu0 0
      %1045 = vmatpush.bf16.msra.mxu0 0
      %1046 = vmatpush.bf16.msra.mxu0 0
      %1047 = vmatpush.bf16.msra.mxu0 %v1038
      %1048 = vmatmul.bf16.gmra.mxu0 %v1026
      %v1049 = vpop.f32.mrf.mxu0
      %v1050 = vadd.f32 0.0, %v1049
      %v1051 = vpop.f32.mrf.mxu0
      %v1052 = vadd.f32 0.0, %v1051
      %1053 = vmatmul.bf16.gmra.mxu0 %v1029
      %v1054 = vpop.f32.mrf.mxu0
      %v1055 = vadd.f32 0.0, %v1054
      %v1056 = vpop.f32.mrf.mxu0
      %v1057 = vadd.f32 0.0, %v1056
      %1058 = vmatmul.bf16.gmra.mxu0 %v1032
      %v1059 = vpop.f32.mrf.mxu0
      %v1060 = vadd.f32 0.0, %v1059
      %v1061 = vpop.f32.mrf.mxu0
      %v1062 = vadd.f32 0.0, %v1061
      %1063 = vmatmul.bf16.gmra.mxu0 %v1035
      %v1064 = vpop.f32.mrf.mxu0
      %v1065 = vadd.f32 0.0, %v1064
      %v1066 = vpop.f32.mrf.mxu0
      %v1067 = vadd.f32 0.0, %v1066
      %1068 = vdwg.mxu0
      %v1069 = vadd.f32 %v986, %v1050
      %v1070 = vadd.f32 %v987, %v1052
      %v1071 = vadd.f32 %v988, %v1055
      %v1072 = vadd.f32 %v989, %v1057
      %v1073 = vadd.f32 %v990, %v1060
      %v1074 = vadd.f32 %v991, %v1062
      %v1075 = vadd.f32 %v992, %v1065
      %v1076 = vadd.f32 %v993, %v1067
      %v1077 = vld [vmem:[%s911] sm:$0xf]
      %v1078 = vld [vmem:[%s911 + $0x4] sm:$0x1]
      %v1079 = vld [vmem:[%s911 + $0x8] sm:$0xf]
      %v1080 = vld [vmem:[%s911 + $0xc] sm:$0x1]
      %v1081 = vld [vmem:[%s911 + $0x10] sm:$0xf]
      %v1082 = vld [vmem:[%s911 + $0x14] sm:$0x1]
      %v1083 = vld [vmem:[%s911 + $0x18] sm:$0xf]
      %v1084 = vld [vmem:[%s911 + $0x1c] sm:$0x1]
      %v1085 = vld [vmem:[%s911 + $0x20] sm:$0xf]
      %v1086 = vld [vmem:[%s911 + $0x24] sm:$0x1]
      %v1087 = vld [vmem:[%s911 + $0x28] sm:$0xf]
      %v1088 = vld [vmem:[%s911 + $0x2c] sm:$0x1]
      %v1089 = vld [vmem:[%s911 + $0x30] sm:$0xf]
      %v1090 = vld [vmem:[%s911 + $0x34] sm:$0x1]
      %v1091 = vld [vmem:[%s911 + $0x38] sm:$0xf]
      %v1092 = vld [vmem:[%s911 + $0x3c] sm:$0x1]
      %v1094 = vshrl.u32 %v1077, 16
      %v1096 = vrot.slane %v1094, 4
      %v1097 = vshll.u32 %v1077, 16
      %v1099 = vrot.slane %v1097, 5
      %v1100 = vor.u32 %v1096, %v1099
      %v1101 = vrot.slane %v1100, 4
      %v1103 = vshll.u32 %v1078, 16
      %v1105 = vrot.slane %v1103, 5
      %v1106 = vsel %vm372, %v1101, %v1105
      %v1108 = vshrl.u32 %v1079, 16
      %v1110 = vrot.slane %v1108, 4
      %v1111 = vshll.u32 %v1079, 16
      %v1113 = vrot.slane %v1111, 5
      %v1114 = vor.u32 %v1110, %v1113
      %v1115 = vrot.slane %v1114, 4
      %v1117 = vshll.u32 %v1080, 16
      %v1119 = vrot.slane %v1117, 5
      %v1120 = vsel %vm372, %v1115, %v1119
      %v1122 = vshrl.u32 %v1081, 16
      %v1124 = vrot.slane %v1122, 4
      %v1125 = vshll.u32 %v1081, 16
      %v1127 = vrot.slane %v1125, 5
      %v1128 = vor.u32 %v1124, %v1127
      %v1129 = vrot.slane %v1128, 4
      %v1131 = vshll.u32 %v1082, 16
      %v1133 = vrot.slane %v1131, 5
      %v1134 = vsel %vm372, %v1129, %v1133
      %v1136 = vshrl.u32 %v1083, 16
      %v1138 = vrot.slane %v1136, 4
      %v1139 = vshll.u32 %v1083, 16
      %v1141 = vrot.slane %v1139, 5
      %v1142 = vor.u32 %v1138, %v1141
      %v1143 = vrot.slane %v1142, 4
      %v1145 = vshll.u32 %v1084, 16
      %v1147 = vrot.slane %v1145, 5
      %v1148 = vsel %vm372, %v1143, %v1147
      %v1150 = vshrl.u32 %v1085, 16
      %v1152 = vrot.slane %v1150, 4
      %v1153 = vshll.u32 %v1085, 16
      %v1155 = vrot.slane %v1153, 5
      %v1156 = vor.u32 %v1152, %v1155
      %v1157 = vrot.slane %v1156, 4
      %v1159 = vshll.u32 %v1086, 16
      %v1161 = vrot.slane %v1159, 5
      %v1162 = vsel %vm372, %v1157, %v1161
      %v1164 = vshrl.u32 %v1087, 16
      %v1166 = vrot.slane %v1164, 4
      %v1167 = vshll.u32 %v1087, 16
      %v1169 = vrot.slane %v1167, 5
      %v1170 = vor.u32 %v1166, %v1169
      %v1171 = vrot.slane %v1170, 4
      %v1173 = vshll.u32 %v1088, 16
      %v1175 = vrot.slane %v1173, 5
      %v1176 = vsel %vm372, %v1171, %v1175
      %v1178 = vshrl.u32 %v1089, 16
      %v1180 = vrot.slane %v1178, 4
      %v1181 = vshll.u32 %v1089, 16
      %v1183 = vrot.slane %v1181, 5
      %v1184 = vor.u32 %v1180, %v1183
      %v1185 = vrot.slane %v1184, 4
      %v1187 = vshll.u32 %v1090, 16
      %v1189 = vrot.slane %v1187, 5
      %v1190 = vsel %vm372, %v1185, %v1189
      %v1192 = vshrl.u32 %v1091, 16
      %v1194 = vrot.slane %v1192, 4
      %v1195 = vshll.u32 %v1091, 16
      %v1197 = vrot.slane %v1195, 5
      %v1198 = vor.u32 %v1194, %v1197
      %v1199 = vrot.slane %v1198, 4
      %v1201 = vshll.u32 %v1092, 16
      %v1203 = vrot.slane %v1201, 5
      %v1204 = vsel %vm372, %v1199, %v1203
      %s1205 = scalar_lea.vmem %s1, 16
      %v1206 = vld [vmem:[%s1205] sm:$0x3]
      %v1207 = vunpack.c.l.b16 %v1106
      %v1208 = vunpack.c.l.b16 %v1120
      %v1209 = vunpack.c.l.b16 %v1134
      %v1210 = vunpack.c.l.b16 %v1148
      %v1211 = vunpack.c.l.b16 %v1162
      %v1212 = vunpack.c.l.b16 %v1176
      %v1213 = vunpack.c.l.b16 %v1190
      %v1214 = vunpack.c.l.b16 %v1204
      %v1215 = vpack.c.b16 %v1208, %v1207
      %v1216 = vpack.c.b16 %v1210, %v1209
      %v1217 = vpack.c.b16 %v1212, %v1211
      %v1218 = vpack.c.b16 %v1214, %v1213
      %v1220 = vsel %vm244, %v1215, 0
      %v1223 = vsel %vm244, %v1216, 0
      %v1226 = vsel %vm244, %v1217, 0
      %v1229 = vsel %vm244, %v1218, 0
      %v1232 = vsel %vm257, %v1206, 0
      %1234 = vmatpush.bf16.msra.mxu0 0
      %1235 = vmatpush.bf16.msra.mxu0 0
      %1236 = vmatpush.bf16.msra.mxu0 0
      %1237 = vmatpush.bf16.msra.mxu0 0
      %1238 = vmatpush.bf16.msra.mxu0 0
      %1239 = vmatpush.bf16.msra.mxu0 0
      %1240 = vmatpush.bf16.msra.mxu0 0
      %1241 = vmatpush.bf16.msra.mxu0 %v1232
      %1242 = vmatmul.bf16.gmra.mxu0 %v1220
      %v1243 = vpop.f32.mrf.mxu0
      %v1244 = vadd.f32 0.0, %v1243
      %v1245 = vpop.f32.mrf.mxu0
      %v1246 = vadd.f32 0.0, %v1245
      %1247 = vmatmul.bf16.gmra.mxu0 %v1223
      %v1248 = vpop.f32.mrf.mxu0
      %v1249 = vadd.f32 0.0, %v1248
      %v1250 = vpop.f32.mrf.mxu0
      %v1251 = vadd.f32 0.0, %v1250
      %1252 = vmatmul.bf16.gmra.mxu0 %v1226
      %v1253 = vpop.f32.mrf.mxu0
      %v1254 = vadd.f32 0.0, %v1253
      %v1255 = vpop.f32.mrf.mxu0
      %v1256 = vadd.f32 0.0, %v1255
      %1257 = vmatmul.bf16.gmra.mxu0 %v1229
      %v1258 = vpop.f32.mrf.mxu0
      %v1259 = vadd.f32 0.0, %v1258
      %v1260 = vpop.f32.mrf.mxu0
      %v1261 = vadd.f32 0.0, %v1260
      %1262 = vdwg.mxu0
      %v1263 = vadd.f32 %v1069, %v1244
      %v1264 = vadd.f32 %v1070, %v1246
      %v1265 = vadd.f32 %v1071, %v1249
      %v1266 = vadd.f32 %v1072, %v1251
      %v1267 = vadd.f32 %v1073, %v1254
      %v1268 = vadd.f32 %v1074, %v1256
      %v1269 = vadd.f32 %v1075, %v1259
      %v1270 = vadd.f32 %v1076, %v1261
      %v1271 = vld [vmem:[%s2] sm:$0x1]
      %v1273 = vperm.slane %v1271, 0
      %v1275 = vmul.f32 %v1263, %v1273
      %v1276 = vmul.f32 %v1264, %v1273
      %v1277 = vmul.f32 %v1265, %v1273
      %v1278 = vmul.f32 %v1266, %v1273
      %v1279 = vmul.f32 %v1267, %v1273
      %v1280 = vmul.f32 %v1268, %v1273
      %v1281 = vmul.f32 %v1269, %v1273
      %v1282 = vmul.f32 %v1270, %v1273
      %v1283 = vld [vmem:[%s3] sm:$0x1]
      %v1285 = vperm.slane %v1283, 0
      %v1287 = vadd.f32 %v1275, %v1285
      %v1288 = vadd.f32 %v1276, %v1285
      %v1289 = vadd.f32 %v1277, %v1285
      %v1290 = vadd.f32 %v1278, %v1285
      %v1291 = vadd.f32 %v1279, %v1285
      %v1292 = vadd.f32 %v1280, %v1285
      %v1293 = vadd.f32 %v1281, %v1285
      %v1294 = vadd.f32 %v1282, %v1285
      %v1295 = vmax.f32 %v1287, 0.0
      %v1296 = vmax.f32 %v1288, 0.0
      %v1297 = vmax.f32 %v1289, 0.0
      %v1298 = vmax.f32 %v1290, 0.0
      %v1299 = vmax.f32 %v1291, 0.0
      %v1300 = vmax.f32 %v1292, 0.0
      %v1301 = vmax.f32 %v1293, 0.0
      %v1302 = vmax.f32 %v1294, 0.0
      %v1303 = vpack.c.bf16 %v1295, %v1295
      %v1304 = vpack.c.bf16 %v1296, %v1296
      %v1305 = vpack.c.bf16 %v1297, %v1297
      %v1306 = vpack.c.bf16 %v1298, %v1298
      %v1307 = vpack.c.bf16 %v1299, %v1299
      %v1308 = vpack.c.bf16 %v1300, %v1300
      %v1309 = vpack.c.bf16 %v1301, %v1301
      %v1310 = vpack.c.bf16 %v1302, %v1302
      %vm1311 = vcmask 60416
      %1312 = vst.msk [vmem:[%s202] sm:$0xf] %vm1311, %v1303
      %1313 = vst.msk [vmem:[%s202 + $0x4] sm:$0xf] %vm1311, %v1304
      %1314 = vst.msk [vmem:[%s202 + $0x8] sm:$0xf] %vm1311, %v1305
      %1315 = vst.msk [vmem:[%s202 + $0xc] sm:$0xf] %vm1311, %v1306
      %1316 = vst.msk [vmem:[%s202 + $0x10] sm:$0xf] %vm1311, %v1307
      %1317 = vst.msk [vmem:[%s202 + $0x14] sm:$0xf] %vm1311, %v1308
      %1318 = vst.msk [vmem:[%s202 + $0x18] sm:$0xf] %vm1311, %v1309
      %1319 = vst.msk [vmem:[%s202 + $0x1c] sm:$0xf] %vm1311, %v1310
      %p1320 = scmp.lt.s32.totalorder %s15, 1
      %s1321 = scalar_select %p1320, %s15, 1
      %s1322 = smul.addr %s1321, 8
      %s1323 = smul.addr %s1322, 4
      %s1324 = scalar_lea.vmem %s4, %s1323
      // Predicated region
      $region37: #{tpu_custom_call.1} parent=35 // pred_check
        %p1325 = pneg %p122
      $region38: #{tpu_custom_call.1} parent=35 // pred_check_branch
        %1327 = sbr.rel (%p1325) target = $region40
      $region39: #{tpu_custom_call.1} parent=35 // pred_region
        _
      $region40: #{tpu_custom_call.1} parent=35 // pred_fallthru
        _
    $region36: #{tpu_custom_call.1} parent=5 // pred_fallthru
      _
    %p1328 = scmp.le.s32.totalorder 2, %s10
    // Predicated region
    $region41: #{tpu_custom_call.1} parent=5 // pred_check
      %p1329 = pneg %p1328
    $region42: #{tpu_custom_call.1} parent=5 // pred_check_branch
      %1331 = sbr.rel (%p1329) target = $region44
    $region43: #{tpu_custom_call.1} parent=5 // pred_region
      %s1332 = ssub.s32 %s10, 2
      // Predicated region
      $region45: #{tpu_custom_call.1} parent=43 // pred_check
        %p1333 = pneg %p128
      $region46: #{tpu_custom_call.1} parent=43 // pred_check_branch
        %1335 = sbr.rel (%p1333) target = $region48
      $region47: #{tpu_custom_call.1} parent=43 // pred_region
        %p1336 = scmp.lt.s32.totalorder %s16, 1
        %s1337 = scalar_select %p1336, %s16, 1
        %s1338 = smul.addr %s1337, 8
        %s1339 = smul.addr %s1338, 4
        %s1340 = scalar_lea.vmem %s4, %s1339
      $region48: #{tpu_custom_call.1} parent=43 // pred_fallthru
        _
    $region44: #{tpu_custom_call.1} parent=5 // pred_fallthru
      _
  $region6: #{tpu_custom_call.1} parent=0 // loop_footer
    %s14 = sadd.s32 1, %s10
  $region7: #{tpu_custom_call.1} parent=0 // loop_footer_branch
    %9 = sbr.rel target = $region3
  $region8: #{tpu_custom_call.1} parent=0 // loop_exit
    _

</llo_original>
